<compile_context>
chip_gen: v6e
topology: v6e:2x2x1
jax: 0.10.0
libtpu: 0.0.40
codegen_flags: <defaults>
</compile_context>

<pallas_src>
import jax
import jax.numpy as jnp
from jax.experimental import pallas as pl
from jax.experimental.pallas import tpu as pltpu

KSIZE = 7
PAD = (KSIZE - 1) // 2


def cbam_kernel(x_ref, w1t_ref, b1_ref, w2t_ref, b2_ref, convm_ref, bn_ref,
                o_ref):
    # x_ref block: (Nb, C, HW) -- C on sublanes, flattened spatial on lanes.
    nb, C, HW = x_ref.shape
    x = x_ref[...].astype(jnp.float32)                      # (Nb, C, HW)

    # ---------------- Channel attention ----------------
    # Both pool types for all Nb samples go through ONE fused MLP pass.
    avg_p = jnp.mean(x, axis=2)                             # (Nb, C)
    max_p = jnp.max(x, axis=2)                              # (Nb, C)
    p = jnp.concatenate([avg_p, max_p], axis=0)             # (2*Nb, C)

    h = jnp.dot(p, w1t_ref[...],
                preferred_element_type=jnp.float32) + b1_ref[...]
    h = jnp.maximum(h, 0.0)                                 # (2*Nb, Cr)
    att = jnp.dot(h, w2t_ref[...],
                  preferred_element_type=jnp.float32) + b2_ref[...]  # (2*Nb, C)

    channel_att_sum = att[:nb] + att[nb:]                   # (Nb, C)
    scale_c = jax.nn.sigmoid(channel_att_sum)               # (Nb, C)
    x_ca = x * scale_c[:, :, None]                          # (Nb, C, HW)

    # ---------------- Spatial attention ----------------
    # ChannelPool: [max over C ; mean over C]  (max first, then mean).
    cmax = jnp.max(x_ca, axis=1)                            # (Nb, HW)
    cmean = jnp.mean(x_ca, axis=1)                          # (Nb, HW)
    comp = jnp.concatenate([cmax, cmean], axis=1)           # (Nb, 2*HW)

    # 7x7 conv (2 in-channels -> 1 out-channel, pad 3) as a single matmul
    # against the precomputed dense conv matrix.
    y = jnp.dot(comp, convm_ref[...],
                preferred_element_type=jnp.float32)         # (Nb, HW)

    # BatchNorm (eval mode), pre-folded into scale/bias scalars (SMEM).
    scale_s = jax.nn.sigmoid(y * bn_ref[0] + bn_ref[1])     # (Nb, HW)

    o_ref[...] = (x_ca * scale_s[:, None, :]).astype(o_ref.dtype)


def _conv_to_matmul(conv_w, H, W):
    """Dense (2*H*W, H*W) matrix M so that conv2d(comp, conv_w, pad=3) ==
    comp_flat @ M, where comp_flat = concat([max_flat, mean_flat], axis=-1)."""
    w = conv_w[0].astype(jnp.float32)                       # (2, 7, 7)
    yi = jnp.arange(H)[:, None, None, None]
    xi = jnp.arange(W)[None, :, None, None]
    yo = jnp.arange(H)[None, None, :, None]
    xo = jnp.arange(W)[None, None, None, :]
    dy = yi - yo + PAD
    dx = xi - xo + PAD
    valid = (dy >= 0) & (dy < KSIZE) & (dx >= 0) & (dx < KSIZE)
    dyc = jnp.clip(dy, 0, KSIZE - 1)
    dxc = jnp.clip(dx, 0, KSIZE - 1)
    m = jnp.where(valid[None], w[:, dyc, dxc], 0.0)         # (2, H, W, H, W)
    return m.reshape(2 * H * W, H * W)


def _pick_block_batch(n, c, hw):
    """Nb samples per grid step: ~512 KiB blocks, but keep >=2 grid steps when
    possible (v7x has 2 TensorCores sharding the parallel batch axis)."""
    target = max(1, (512 * 1024) // (c * hw * 4))
    if n >= 2:
        target = min(target, n // 2)
    target = max(1, min(target, n))
    nb = 1
    for d in range(1, n + 1):
        if n % d == 0 and d <= target:
            nb = d
    return nb


@jax.jit
def cbam_forward(x, w1, b1, w2, b2, conv_w, bn_params):
    N, C, H, W = x.shape
    Cr = w1.shape[0]
    HW = H * W

    x_flat = x.reshape(N, C, HW)                 # lane-dense spatial axis
    w1t = w1.T                                   # (C, Cr)   nn.Linear: p @ W1.T
    w2t = w2.T                                   # (Cr, C)
    b1r = b1.reshape(1, Cr)
    b2r = b2.reshape(1, C)
    conv_m = _conv_to_matmul(conv_w, H, W)       # (2*HW, HW)

    nb = _pick_block_batch(N, C, HW)
    grid = (N // nb,)

    out_flat = pl.pallas_call(
        cbam_kernel,
        out_shape=jax.ShapeDtypeStruct((N, C, HW), x.dtype),
        grid_spec=pltpu.PrefetchScalarGridSpec(
            num_scalar_prefetch=0,
            grid=grid,
            in_specs=[
                pl.BlockSpec((nb, C, HW), lambda n: (n, 0, 0)),    # x
                pl.BlockSpec((C, Cr), lambda n: (0, 0)),           # W1^T
                pl.BlockSpec((1, Cr), lambda n: (0, 0)),           # b1
                pl.BlockSpec((Cr, C), lambda n: (0, 0)),           # W2^T
                pl.BlockSpec((1, C), lambda n: (0, 0)),            # b2
                pl.BlockSpec((2 * HW, HW), lambda n: (0, 0)),      # conv matrix
                pl.BlockSpec(memory_space=pltpu.MemorySpace.SMEM), # bn scalars
            ],
            out_specs=pl.BlockSpec((nb, C, HW), lambda n: (n, 0, 0)),
        ),
        compiler_params=pltpu.CompilerParams(
            dimension_semantics=("parallel",)),
    )(x_flat, w1t, b1r, w2t, b2r, conv_m, bn_params)

    return out_flat.reshape(N, C, H, W)


def cbam_reference(x, w1, b1, w2, b2, conv_w, bn_params):
    """Plain-JAX reference mirroring the PyTorch forward."""
    xf = x.astype(jnp.float32)
    avg = xf.mean(axis=(2, 3))                    # (N, C)
    mx = xf.max(axis=(2, 3))                      # (N, C)

    def mlp(p):
        h = jnp.maximum(p @ w1.T + b1, 0.0)
        return h @ w2.T + b2

    att = mlp(avg) + mlp(mx)
    sc = jax.nn.sigmoid(att)[:, :, None, None]
    x_ca = xf * sc

    cmax = x_ca.max(axis=1, keepdims=True)
    cmean = x_ca.mean(axis=1, keepdims=True)
    comp = jnp.concatenate([cmax, cmean], axis=1)  # (N, 2, H, W)
    y = jax.lax.conv_general_dilated(
        comp, conv_w, window_strides=(1, 1), padding=((PAD, PAD), (PAD, PAD)),
        dimension_numbers=("NCHW", "OIHW", "NCHW"))
    y = y * bn_params[0] + bn_params[1]
    ss = jax.nn.sigmoid(y)
    return x_ca * ss


if __name__ == "__main__":
    N, C, H, W = 2, 16, 16, 16
    reduction_ratio = 4
    Cr = C // reduction_ratio

    key = jax.random.PRNGKey(0)
    kx, k1, k2, k3, k4, k5 = jax.random.split(key, 6)

    x = jax.random.normal(kx, (N, C, H, W), dtype=jnp.float32)

    # Channel-attention MLP parameters (nn.Linear conventions: x @ W.T + b)
    w1 = jax.random.normal(k1, (Cr, C), dtype=jnp.float32) * 0.2
    b1 = jax.random.normal(k2, (Cr,), dtype=jnp.float32) * 0.1
    w2 = jax.random.normal(k3, (C, Cr), dtype=jnp.float32) * 0.2
    b2 = jax.random.normal(k4, (C,), dtype=jnp.float32) * 0.1

    # Spatial-attention conv: Conv2d(2, 1, 7, padding=3, bias=False)
    conv_w = jax.random.normal(k5, (1, 2, KSIZE, KSIZE), dtype=jnp.float32) * 0.1

    # BatchNorm2d(1) in eval mode with default stats -> folded scale/bias.
    gamma, beta, run_mean, run_var, eps = 1.0, 0.0, 0.0, 1.0, 1e-5
    bn_scale = gamma / (run_var + eps) ** 0.5
    bn_bias = beta - run_mean * bn_scale
    bn_params = jnp.array([bn_scale, bn_bias], dtype=jnp.float32)

    out = cbam_forward(x, w1, b1, w2, b2, conv_w, bn_params)
    out = jax.block_until_ready(out)

    ref = cbam_reference(x, w1, b1, w2, b2, conv_w, bn_params)
    assert out.shape == (N, C, H, W)
    assert jnp.allclose(out, ref, rtol=1e-4, atol=1e-4), (
        float(jnp.max(jnp.abs(out - ref))))

    print("KERNEL_OK")
</pallas_src>

<mosaic_0001>
module attributes {stable_mosaic.version = 11 : i64} {
  func.func @cbam_kernel(%arg0: i32, %arg1: memref<1x16x256xf32, #tpu.memory_space<vmem>>, %arg2: memref<16x4xf32, #tpu.memory_space<vmem>>, %arg3: memref<1x4xf32, #tpu.memory_space<vmem>>, %arg4: memref<4x16xf32, #tpu.memory_space<vmem>>, %arg5: memref<1x16xf32, #tpu.memory_space<vmem>>, %arg6: memref<512x256xf32, #tpu.memory_space<vmem>>, %arg7: memref<2xf32, #tpu.memory_space<smem>>, %arg8: memref<1x16x256xf32, #tpu.memory_space<vmem>>) attributes {dimension_semantics = [#tpu.dimension_semantics<parallel>], iteration_bounds = array<i64: 2>, scalar_prefetch = 0 : i64, scratch_operands = 0 : i64, tpu.core_type = #tpu.core_type<tc>, window_params = [{transform_indices = @transform_0, window_bounds = array<i64: 1, 16, 256>}, {pipeline_mode = #tpu.pipeline_mode<synchronous>, transform_indices = @transform_1, window_bounds = array<i64: 16, 4>}, {pipeline_mode = #tpu.pipeline_mode<synchronous>, transform_indices = @transform_2, window_bounds = array<i64: 1, 4>}, {pipeline_mode = #tpu.pipeline_mode<synchronous>, transform_indices = @transform_3, window_bounds = array<i64: 4, 16>}, {pipeline_mode = #tpu.pipeline_mode<synchronous>, transform_indices = @transform_4, window_bounds = array<i64: 1, 16>}, {pipeline_mode = #tpu.pipeline_mode<synchronous>, transform_indices = @transform_5, window_bounds = array<i64: 512, 256>}, {transform_indices = @transform_6, window_bounds = array<i64: 2>}, {transform_indices = @transform_7, window_bounds = array<i64: 1, 16, 256>}]} {
    %c0 = arith.constant 0 : index
    %c0_0 = arith.constant 0 : index
    %c0_1 = arith.constant 0 : index
    %0 = vector.load %arg1[%c0, %c0_0, %c0_1] : memref<1x16x256xf32, #tpu.memory_space<vmem>>, vector<1x16x256xf32>
    %cst = arith.constant dense<0.000000e+00> : vector<1x16xf32>
    %1 = vector.multi_reduction <add>, %0, %cst [2] : vector<1x16x256xf32> to vector<1x16xf32>
    %cst_2 = arith.constant 2.560000e+02 : f32
    %2 = vector.broadcast %cst_2 : f32 to vector<1x16xf32>
    %3 = arith.divf %1, %2 : vector<1x16xf32>
    %cst_3 = arith.constant dense<0xFF800000> : vector<1x16xf32>
    %4 = vector.multi_reduction <maximumf>, %0, %cst_3 [2] : vector<1x16x256xf32> to vector<1x16xf32>
    %5 = tpu.concatenate %3, %4 in 0 : vector<1x16xf32>, vector<1x16xf32> -> vector<2x16xf32>
    %c0_4 = arith.constant 0 : index
    %c0_5 = arith.constant 0 : index
    %6 = vector.load %arg2[%c0_4, %c0_5] : memref<16x4xf32, #tpu.memory_space<vmem>>, vector<16x4xf32>
    %cst_6 = arith.constant dense<0.000000e+00> : vector<2x4xf32>
    %7 = tpu.matmul %5, %6, %cst_6 {dimension_numbers = #tpu.dot_dimension_numbers<[1], [0], [0], [1], [0, 0, 1, 1], [], []>} : vector<2x16xf32>, vector<16x4xf32>, vector<2x4xf32> -> vector<2x4xf32>
    %c0_7 = arith.constant 0 : index
    %c0_8 = arith.constant 0 : index
    %8 = vector.load %arg3[%c0_7, %c0_8] : memref<1x4xf32, #tpu.memory_space<vmem>>, vector<1x4xf32>
    %9 = vector.broadcast %8 : vector<1x4xf32> to vector<2x4xf32>
    %10 = arith.addf %7, %9 : vector<2x4xf32>
    %cst_9 = arith.constant 0.000000e+00 : f32
    %11 = vector.broadcast %cst_9 : f32 to vector<2x4xf32>
    %12 = arith.maximumf %10, %11 : vector<2x4xf32>
    %c0_10 = arith.constant 0 : index
    %c0_11 = arith.constant 0 : index
    %13 = vector.load %arg4[%c0_10, %c0_11] : memref<4x16xf32, #tpu.memory_space<vmem>>, vector<4x16xf32>
    %cst_12 = arith.constant dense<0.000000e+00> : vector<2x16xf32>
    %14 = tpu.matmul %12, %13, %cst_12 {dimension_numbers = #tpu.dot_dimension_numbers<[1], [0], [0], [1], [0, 0, 1, 1], [], []>} : vector<2x4xf32>, vector<4x16xf32>, vector<2x16xf32> -> vector<2x16xf32>
    %c0_13 = arith.constant 0 : index
    %c0_14 = arith.constant 0 : index
    %15 = vector.load %arg5[%c0_13, %c0_14] : memref<1x16xf32, #tpu.memory_space<vmem>>, vector<1x16xf32>
    %16 = vector.broadcast %15 : vector<1x16xf32> to vector<2x16xf32>
    %17 = arith.addf %14, %16 : vector<2x16xf32>
    %18 = vector.extract_strided_slice %17 {offsets = [0, 0], sizes = [1, 16], strides = [1, 1]} : vector<2x16xf32> to vector<1x16xf32>
    %19 = vector.extract_strided_slice %17 {offsets = [1, 0], sizes = [1, 16], strides = [1, 1]} : vector<2x16xf32> to vector<1x16xf32>
    %20 = arith.addf %18, %19 : vector<1x16xf32>
    %21 = arith.negf %20 : vector<1x16xf32>
    %22 = math.exp %21 : vector<1x16xf32>
    %cst_15 = arith.constant 1.000000e+00 : f32
    %23 = vector.broadcast %cst_15 : f32 to vector<1x16xf32>
    %24 = arith.addf %23, %22 : vector<1x16xf32>
    %25 = arith.divf %23, %24 : vector<1x16xf32>
    %26 = vector.shape_cast %25 : vector<1x16xf32> to vector<1x16x1xf32>
    %27 = vector.broadcast %26 : vector<1x16x1xf32> to vector<1x16x256xf32>
    %28 = arith.mulf %0, %27 : vector<1x16x256xf32>
    %cst_16 = arith.constant dense<0xFF800000> : vector<1x256xf32>
    %29 = vector.multi_reduction <maximumf>, %28, %cst_16 [1] : vector<1x16x256xf32> to vector<1x256xf32>
    %cst_17 = arith.constant dense<0.000000e+00> : vector<1x256xf32>
    %30 = vector.multi_reduction <add>, %28, %cst_17 [1] : vector<1x16x256xf32> to vector<1x256xf32>
    %cst_18 = arith.constant 1.600000e+01 : f32
    %31 = vector.broadcast %cst_18 : f32 to vector<1x256xf32>
    %32 = arith.divf %30, %31 : vector<1x256xf32>
    %33 = tpu.concatenate %29, %32 in 1 : vector<1x256xf32>, vector<1x256xf32> -> vector<1x512xf32>
    %c0_19 = arith.constant 0 : index
    %c0_20 = arith.constant 0 : index
    %34 = vector.load %arg6[%c0_19, %c0_20] : memref<512x256xf32, #tpu.memory_space<vmem>>, vector<512x256xf32>
    %cst_21 = arith.constant dense<0.000000e+00> : vector<1x256xf32>
    %35 = tpu.matmul %33, %34, %cst_21 {dimension_numbers = #tpu.dot_dimension_numbers<[1], [0], [0], [1], [0, 0, 1, 1], [], []>} : vector<1x512xf32>, vector<512x256xf32>, vector<1x256xf32> -> vector<1x256xf32>
    %c0_22 = arith.constant 0 : index
    %36 = memref.load %arg7[%c0_22] : memref<2xf32, #tpu.memory_space<smem>>
    %37 = vector.broadcast %36 : f32 to vector<1x256xf32>
    %38 = arith.mulf %35, %37 : vector<1x256xf32>
    %c1 = arith.constant 1 : index
    %39 = memref.load %arg7[%c1] : memref<2xf32, #tpu.memory_space<smem>>
    %40 = vector.broadcast %39 : f32 to vector<1x256xf32>
    %41 = arith.addf %38, %40 : vector<1x256xf32>
    %42 = arith.negf %41 : vector<1x256xf32>
    %43 = math.exp %42 : vector<1x256xf32>
    %cst_23 = arith.constant 1.000000e+00 : f32
    %44 = vector.broadcast %cst_23 : f32 to vector<1x256xf32>
    %45 = arith.addf %44, %43 : vector<1x256xf32>
    %46 = arith.divf %44, %45 : vector<1x256xf32>
    %47 = vector.shape_cast %46 : vector<1x256xf32> to vector<1x1x256xf32>
    %48 = vector.broadcast %47 : vector<1x1x256xf32> to vector<1x16x256xf32>
    %49 = arith.mulf %28, %48 : vector<1x16x256xf32>
    %c0_24 = arith.constant 0 : index
    %c0_25 = arith.constant 0 : index
    %c0_26 = arith.constant 0 : index
    %50 = vector.load %arg8[%c0_24, %c0_25, %c0_26] : memref<1x16x256xf32, #tpu.memory_space<vmem>>, vector<1x16x256xf32>
    tpu.vector_store %arg8[%c0_24, %c0_25, %c0_26], %49 {strides = array<i32>} : memref<1x16x256xf32, #tpu.memory_space<vmem>>, vector<1x16x256xf32>,
    return
  }
  func.func @transform_0(%arg0: i32) -> (i32, i32, i32) {
    %c0_i32 = arith.constant 0 : i32
    %c0_i32_0 = arith.constant 0 : i32
    %c0_i32_1 = arith.constant 0 : i32
    return %arg0, %c0_i32, %c0_i32_0 : i32, i32, i32
  }
  func.func @transform_1(%arg0: i32) -> (i32, i32) {
    %c0_i32 = arith.constant 0 : i32
    %c0_i32_0 = arith.constant 0 : i32
    %c0_i32_1 = arith.constant 0 : i32
    return %c0_i32, %c0_i32_0 : i32, i32
  }
  func.func @transform_2(%arg0: i32) -> (i32, i32) {
    %c0_i32 = arith.constant 0 : i32
    %c0_i32_0 = arith.constant 0 : i32
    %c0_i32_1 = arith.constant 0 : i32
    return %c0_i32, %c0_i32_0 : i32, i32
  }
  func.func @transform_3(%arg0: i32) -> (i32, i32) {
    %c0_i32 = arith.constant 0 : i32
    %c0_i32_0 = arith.constant 0 : i32
    %c0_i32_1 = arith.constant 0 : i32
    return %c0_i32, %c0_i32_0 : i32, i32
  }
  func.func @transform_4(%arg0: i32) -> (i32, i32) {
    %c0_i32 = arith.constant 0 : i32
    %c0_i32_0 = arith.constant 0 : i32
    %c0_i32_1 = arith.constant 0 : i32
    return %c0_i32, %c0_i32_0 : i32, i32
  }
  func.func @transform_5(%arg0: i32) -> (i32, i32) {
    %c0_i32 = arith.constant 0 : i32
    %c0_i32_0 = arith.constant 0 : i32
    %c0_i32_1 = arith.constant 0 : i32
    return %c0_i32, %c0_i32_0 : i32, i32
  }
  func.func @transform_6(%arg0: i32) -> i32 {
    %c0_i32 = arith.constant 0 : i32
    %c0_i32_0 = arith.constant 0 : i32
    return %c0_i32 : i32
  }
  func.func @transform_7(%arg0: i32) -> (i32, i32, i32) {
    %c0_i32 = arith.constant 0 : i32
    %c0_i32_0 = arith.constant 0 : i32
    %c0_i32_1 = arith.constant 0 : i32
    return %arg0, %c0_i32, %c0_i32_0 : i32, i32, i32
  }
}

</mosaic_0001>

<llo_original>
// kernel: cbam_forward.1
$region0: #{cbam_forward.1}
  #allocation0 [shape = 'u32[]', space=smem, size = 0x4, offset = 0x4, fixed_abs, tag = 'smem constant byte address 0x4 - core index']
  #allocation1 [shape = 'u32[144,128]{1,0:T(1,128)}', space=vmem, size = 0x12000, scoped, tag = 'internal scratch']
  %s0 = inlined_call_operand.vmem [shape: f32[2,16,256], index: 0, kind: input, shape index: {}]
  %s1 = inlined_call_operand.vmem [shape: f32[16,4], index: 1, kind: input, shape index: {}]
  %s2 = inlined_call_operand.vmem [shape: f32[1,4], index: 2, kind: input, shape index: {}]
  %s3 = inlined_call_operand.vmem [shape: f32[4,16], index: 3, kind: input, shape index: {}]
  %s4 = inlined_call_operand.vmem [shape: f32[1,16], index: 4, kind: input, shape index: {}]
  %s5 = inlined_call_operand.vmem [shape: f32[512,256], index: 5, kind: input, shape index: {}]
  %s6 = inlined_call_operand.vmem [shape: f32[2], index: 6, kind: input, shape index: {}]
  %s7 = inlined_call_operand.vmem [shape: f32[2,16,256], index: 7, kind: output, shape index: {}]
  %s8 = sld [smem:[#allocation0]]
  $region65: #{cbam_forward.1} parent=0
    _
  %s10 = ssub.s32 1, %s8
  %s11 = scalar_select 0, %s10, %s8
  $region1: #{cbam_forward.1} parent=0
    #allocation2 [shape = 'u8[512]{0}', space=smem, size = 0x200, scoped, tag = 'input window, operand 6, single buffered']
    #allocation3 [shape = 's32[2]{0}', space=sflag, size = 0x8, scoped, tag = 'scoped memory for cbam_forward.1']
    %12 = vsyncpa [#allocation3], 0
    loop: start=0, step=1, limit=4
    $region2: #{cbam_forward.1} parent=1 // loop_pre_header
      _
    $region3: #{cbam_forward.1} parent=1 // loop_header
      %s14 = sphi 0, %s18
      %p15 = scmp.ge.s32.totalorder %s14, 4
      %s24 = sphi 0, %s26
      %s27 = sphi 0, %s24
      %s28 = sphi 0, %s27
      %s44 = sphi 0, %s28
      %s48 = sphi 0, %s48
      %s50 = sphi 0, %s48
      %s51 = sphi 0, %s50
      %s65 = sphi 0, %s51
      %s69 = sphi 0, %s69
      %s71 = sphi 0, %s69
      %s72 = sphi 0, %s71
      %s86 = sphi 0, %s72
      %s90 = sphi 0, %s90
      %s92 = sphi 0, %s90
      %s93 = sphi 0, %s92
      %s107 = sphi 0, %s93
      %s111 = sphi 0, %s111
      %s113 = sphi 0, %s111
      %s114 = sphi 0, %s113
      %s128 = sphi 0, %s114
      %s132 = sphi 0, %s132
      %s134 = sphi 0, %s132
      %s135 = sphi 0, %s134
      %s149 = sphi 0, %s135
      %s153 = sphi 0, %s153
      %s155 = sphi 0, %s153
      %s156 = sphi 0, %s155
      %s170 = sphi 0, %s156
      %s176 = sphi 0, %s178
      %s179 = sphi 0, %s176
      %s180 = sphi 0, %s179
      %s196 = sphi 0, %s180
    $region4: #{cbam_forward.1} parent=1 // loop_header_branch
      %17 = sbr.rel (%p15) target = $region8
    $region5: #{cbam_forward.1} parent=1 // loop_body
      %s19 = ssub.s32 %s14, 1
      %s20 = ssub.s32 %s14, 2
      %s21 = sadd.s32 %s14, 1
      %s22 = ssub.s32 %s14, %s21
      %p23 = scmp.eq.s32.totalorder %s22, 0
      %s25 = sadd.s32 %s24, 1
      %s26 = scalar_select %p23, %s24, %s25
      %p29 = pneg %p23
      %p30 = scmp.eq.s32.totalorder %s14, 1
      %p31 = por %p29, %p30
      %p32 = scmp.ne.s32.totalorder %s24, %s27
      %p33 = scmp.eq.s32.totalorder %s14, 0
      %p34 = por %p32, %p33
      %p35 = scmp.ne.s32.totalorder %s24, %s27
      %p36 = scmp.eq.s32.totalorder %s19, 1
      %p37 = por %p35, %p36
      %p38 = scmp.ne.s32.totalorder %s27, %s28
      %p39 = scmp.eq.s32.totalorder %s19, 0
      %p40 = por %p38, %p39
      %p41 = scmp.ne.s32.totalorder %s27, %s28
      %p42 = scmp.eq.s32.totalorder %s20, 1
      %p43 = por %p41, %p42
      %p45 = scmp.ne.s32.totalorder %s28, %s44
      %p46 = scmp.eq.s32.totalorder %s20, 0
      %p47 = por %p45, %p46
      %s49 = sadd.s32 %s48, 1
      %p52 = scmp.eq.s32.totalorder %s14, 1
      %p53 = scmp.ne.s32.totalorder %s48, %s50
      %p54 = scmp.eq.s32.totalorder %s14, 0
      %p55 = por %p53, %p54
      %p56 = scmp.ne.s32.totalorder %s48, %s50
      %p57 = scmp.eq.s32.totalorder %s19, 1
      %p58 = por %p56, %p57
      %p59 = scmp.ne.s32.totalorder %s50, %s51
      %p60 = scmp.eq.s32.totalorder %s19, 0
      %p61 = por %p59, %p60
      %p62 = scmp.ne.s32.totalorder %s50, %s51
      %p63 = scmp.eq.s32.totalorder %s20, 1
      %p64 = por %p62, %p63
      %p66 = scmp.ne.s32.totalorder %s51, %s65
      %p67 = scmp.eq.s32.totalorder %s20, 0
      %p68 = por %p66, %p67
      %s70 = sadd.s32 %s69, 1
      %p73 = scmp.eq.s32.totalorder %s14, 1
      %p74 = scmp.ne.s32.totalorder %s69, %s71
      %p75 = scmp.eq.s32.totalorder %s14, 0
      %p76 = por %p74, %p75
      %p77 = scmp.ne.s32.totalorder %s69, %s71
      %p78 = scmp.eq.s32.totalorder %s19, 1
      %p79 = por %p77, %p78
      %p80 = scmp.ne.s32.totalorder %s71, %s72
      %p81 = scmp.eq.s32.totalorder %s19, 0
      %p82 = por %p80, %p81
      %p83 = scmp.ne.s32.totalorder %s71, %s72
      %p84 = scmp.eq.s32.totalorder %s20, 1
      %p85 = por %p83, %p84
      %p87 = scmp.ne.s32.totalorder %s72, %s86
      %p88 = scmp.eq.s32.totalorder %s20, 0
      %p89 = por %p87, %p88
      %s91 = sadd.s32 %s90, 1
      %p94 = scmp.eq.s32.totalorder %s14, 1
      %p95 = scmp.ne.s32.totalorder %s90, %s92
      %p96 = scmp.eq.s32.totalorder %s14, 0
      %p97 = por %p95, %p96
      %p98 = scmp.ne.s32.totalorder %s90, %s92
      %p99 = scmp.eq.s32.totalorder %s19, 1
      %p100 = por %p98, %p99
      %p101 = scmp.ne.s32.totalorder %s92, %s93
      %p102 = scmp.eq.s32.totalorder %s19, 0
      %p103 = por %p101, %p102
      %p104 = scmp.ne.s32.totalorder %s92, %s93
      %p105 = scmp.eq.s32.totalorder %s20, 1
      %p106 = por %p104, %p105
      %p108 = scmp.ne.s32.totalorder %s93, %s107
      %p109 = scmp.eq.s32.totalorder %s20, 0
      %p110 = por %p108, %p109
      %s112 = sadd.s32 %s111, 1
      %p115 = scmp.eq.s32.totalorder %s14, 1
      %p116 = scmp.ne.s32.totalorder %s111, %s113
      %p117 = scmp.eq.s32.totalorder %s14, 0
      %p118 = por %p116, %p117
      %p119 = scmp.ne.s32.totalorder %s111, %s113
      %p120 = scmp.eq.s32.totalorder %s19, 1
      %p121 = por %p119, %p120
      %p122 = scmp.ne.s32.totalorder %s113, %s114
      %p123 = scmp.eq.s32.totalorder %s19, 0
      %p124 = por %p122, %p123
      %p125 = scmp.ne.s32.totalorder %s113, %s114
      %p126 = scmp.eq.s32.totalorder %s20, 1
      %p127 = por %p125, %p126
      %p129 = scmp.ne.s32.totalorder %s114, %s128
      %p130 = scmp.eq.s32.totalorder %s20, 0
      %p131 = por %p129, %p130
      %s133 = sadd.s32 %s132, 1
      %p136 = scmp.eq.s32.totalorder %s14, 1
      %p137 = scmp.ne.s32.totalorder %s132, %s134
      %p138 = scmp.eq.s32.totalorder %s14, 0
      %p139 = por %p137, %p138
      %p140 = scmp.ne.s32.totalorder %s132, %s134
      %p141 = scmp.eq.s32.totalorder %s19, 1
      %p142 = por %p140, %p141
      %p143 = scmp.ne.s32.totalorder %s134, %s135
      %p144 = scmp.eq.s32.totalorder %s19, 0
      %p145 = por %p143, %p144
      %p146 = scmp.ne.s32.totalorder %s134, %s135
      %p147 = scmp.eq.s32.totalorder %s20, 1
      %p148 = por %p146, %p147
      %p150 = scmp.ne.s32.totalorder %s135, %s149
      %p151 = scmp.eq.s32.totalorder %s20, 0
      %p152 = por %p150, %p151
      %s154 = sadd.s32 %s153, 1
      %p157 = scmp.eq.s32.totalorder %s14, 1
      %p158 = scmp.ne.s32.totalorder %s153, %s155
      %p159 = scmp.eq.s32.totalorder %s14, 0
      %p160 = por %p158, %p159
      %p161 = scmp.ne.s32.totalorder %s153, %s155
      %p162 = scmp.eq.s32.totalorder %s19, 1
      %p163 = por %p161, %p162
      %p164 = scmp.ne.s32.totalorder %s155, %s156
      %p165 = scmp.eq.s32.totalorder %s19, 0
      %p166 = por %p164, %p165
      %p167 = scmp.ne.s32.totalorder %s155, %s156
      %p168 = scmp.eq.s32.totalorder %s20, 1
      %p169 = por %p167, %p168
      %p171 = scmp.ne.s32.totalorder %s156, %s170
      %p172 = scmp.eq.s32.totalorder %s20, 0
      %p173 = por %p171, %p172
      %s174 = ssub.s32 %s14, %s21
      %p175 = scmp.eq.s32.totalorder %s174, 0
      %s177 = sadd.s32 %s176, 1
      %s178 = scalar_select %p175, %s176, %s177
      %p181 = pneg %p175
      %p182 = scmp.eq.s32.totalorder %s14, 1
      %p183 = por %p181, %p182
      %p184 = scmp.ne.s32.totalorder %s176, %s179
      %p185 = scmp.eq.s32.totalorder %s14, 0
      %p186 = por %p184, %p185
      %p187 = scmp.ne.s32.totalorder %s176, %s179
      %p188 = scmp.eq.s32.totalorder %s19, 1
      %p189 = por %p187, %p188
      %p190 = scmp.ne.s32.totalorder %s179, %s180
      %p191 = scmp.eq.s32.totalorder %s19, 0
      %p192 = por %p190, %p191
      %p193 = scmp.ne.s32.totalorder %s179, %s180
      %p194 = scmp.eq.s32.totalorder %s20, 1
      %p195 = por %p193, %p194
      %p197 = scmp.ne.s32.totalorder %s180, %s196
      %p198 = scmp.eq.s32.totalorder %s20, 0
      %p199 = por %p197, %p198
      %p200 = scmp.le.s32.totalorder 1, %s14
      %p201 = scmp.lt.s32.totalorder %s14, 3
      %p202 = pnand %p200, %p201
      %p203 = pneg %p202
      // Predicated region
      $region9: #{cbam_forward.1} parent=5 // pred_check
        _
      $region10: #{cbam_forward.1} parent=5 // pred_check_branch
        %205 = sbr.rel (%p202) target = $region12
      $region11: #{cbam_forward.1} parent=5 // pred_region
        %s206 = ssub.s32 %s14, 1
        // Predicated region
        $region13: #{cbam_forward.1} parent=11 // pred_check
          %p207 = pneg %p61
        $region14: #{cbam_forward.1} parent=11 // pred_check_branch
          %209 = sbr.rel (%p207) target = $region16
        $region15: #{cbam_forward.1} parent=11 // pred_region
          _
        $region16: #{cbam_forward.1} parent=11 // pred_fallthru
          _
        // Predicated region
        $region17: #{cbam_forward.1} parent=11 // pred_check
          %p210 = pneg %p82
        $region18: #{cbam_forward.1} parent=11 // pred_check_branch
          %212 = sbr.rel (%p210) target = $region20
        $region19: #{cbam_forward.1} parent=11 // pred_region
          _
        $region20: #{cbam_forward.1} parent=11 // pred_fallthru
          _
        // Predicated region
        $region21: #{cbam_forward.1} parent=11 // pred_check
          %p213 = pneg %p103
        $region22: #{cbam_forward.1} parent=11 // pred_check_branch
          %215 = sbr.rel (%p213) target = $region24
        $region23: #{cbam_forward.1} parent=11 // pred_region
          _
        $region24: #{cbam_forward.1} parent=11 // pred_fallthru
          _
        // Predicated region
        $region25: #{cbam_forward.1} parent=11 // pred_check
          %p216 = pneg %p124
        $region26: #{cbam_forward.1} parent=11 // pred_check_branch
          %218 = sbr.rel (%p216) target = $region28
        $region27: #{cbam_forward.1} parent=11 // pred_region
          _
        $region28: #{cbam_forward.1} parent=11 // pred_fallthru
          _
        // Predicated region
        $region29: #{cbam_forward.1} parent=11 // pred_check
          %p219 = pneg %p145
        $region30: #{cbam_forward.1} parent=11 // pred_check_branch
          %221 = sbr.rel (%p219) target = $region32
        $region31: #{cbam_forward.1} parent=11 // pred_region
          _
        $region32: #{cbam_forward.1} parent=11 // pred_fallthru
          _
        // Predicated region
        $region33: #{cbam_forward.1} parent=11 // pred_check
          %p222 = pneg %p166
        $region34: #{cbam_forward.1} parent=11 // pred_check_branch
          %224 = sbr.rel (%p222) target = $region36
        $region35: #{cbam_forward.1} parent=11 // pred_region
          %s226 = ssub.s32 16, 16
          %227 = vsyncadd [#allocation3], %s226
          %s229 = sshll.u32 %s6, 4
          %s230 = int_to_ptr.vmem [resolvable:$true] %s229
          %232 = dma.vmem_to_smem %s230, 16, [#allocation2], [#allocation3]
        $region36: #{cbam_forward.1} parent=11 // pred_fallthru
          _
      $region12: #{cbam_forward.1} parent=5 // pred_fallthru
        _
      %p233 = scmp.lt.s32.totalorder %s14, 2
      // Predicated region
      $region37: #{cbam_forward.1} parent=5 // pred_check
        %p234 = pneg %p233
      $region38: #{cbam_forward.1} parent=5 // pred_check_branch
        %236 = sbr.rel (%p234) target = $region40
      $region39: #{cbam_forward.1} parent=5 // pred_region
        // Predicated region
        $region41: #{cbam_forward.1} parent=39 // pred_check
          %p237 = pneg %p34
        $region42: #{cbam_forward.1} parent=39 // pred_check_branch
          %239 = sbr.rel (%p237) target = $region44
        $region43: #{cbam_forward.1} parent=39 // pred_region
          %p240 = scmp.lt.s32.totalorder %s14, 1
          %s241 = scalar_select %p240, %s14, 1
          %s242 = smul.addr %s241, 4
          %s243 = smul.addr %s242, 8
          %s244 = scalar_lea.vmem %s0, %s243
        $region44: #{cbam_forward.1} parent=39 // pred_fallthru
          _
      $region40: #{cbam_forward.1} parent=5 // pred_fallthru
        _
      %p245 = scmp.le.s32.totalorder 1, %s14
      %p246 = scmp.lt.s32.totalorder %s14, 3
      %p247 = pnand %p245, %p246
      %p248 = pneg %p247
      // Predicated region
      $region45: #{cbam_forward.1} parent=5 // pred_check
        _
      $region46: #{cbam_forward.1} parent=5 // pred_check_branch
        %250 = sbr.rel (%p247) target = $region48
      $region47: #{cbam_forward.1} parent=5 // pred_region
        %s251 = ssub.s32 %s14, 1
        // Predicated region
        $region49: #{cbam_forward.1} parent=47 // pred_check
          %p252 = pneg %p166
        $region50: #{cbam_forward.1} parent=47 // pred_check_branch
          %254 = sbr.rel (%p252) target = $region52
        $region51: #{cbam_forward.1} parent=47 // pred_region
          %255 = dma.done [#allocation3], 16
        $region52: #{cbam_forward.1} parent=47 // pred_fallthru
          _
        %256 = sfence
        %p257 = scmp.lt.s32.totalorder %s19, 1
        %s258 = scalar_select %p257, %s19, 1
        %s259 = smul.addr %s258, 4
        %s260 = smul.addr %s259, 8
        %s261 = scalar_lea.vmem %s0, %s260
        %p262 = pneg %p40
        %p263 = pneg %p37
        %p264 = pneg %p61
        %p265 = pneg %p58
        %p266 = pneg %p82
        %p267 = pneg %p79
        %p268 = pneg %p103
        %p269 = pneg %p100
        %p270 = pneg %p124
        %p271 = pneg %p121
        %p272 = pneg %p145
        %p273 = pneg %p142
        %p274 = pneg %p166
        %p275 = pneg %p163
        %p276 = pneg %p192
        %p277 = pneg %p189
        %p278 = scmp.lt.s32.totalorder %s19, 1
        %s279 = scalar_select %p278, %s19, 1
        %s280 = smul.addr %s279, 4
        %s281 = smul.addr %s280, 8
        %s282 = scalar_lea.vmem %s7, %s281
        %p283 = scmp.lt.s32.totalorder %s19, 1
        %s284 = scalar_select %p283, %s19, 1
        %s285 = smul.addr %s284, 4
        %s286 = smul.addr %s285, 8
        %s287 = scalar_lea.vmem %s0, %s286
        %p288 = scmp.lt.s32.totalorder %s19, 1
        %s289 = scalar_select %p288, %s19, 1
        %s290 = smul.addr %s289, 4
        %s291 = smul.addr %s290, 8
        %s292 = scalar_lea.vmem %s7, %s291
        %v293 = vld [vmem:[%s287] sm:$0xff]
        %v294 = vld [vmem:[%s287 + $0x8] sm:$0xff]
        %v295 = vld [vmem:[%s287 + $0x10] sm:$0xff]
        %v296 = vld [vmem:[%s287 + $0x18] sm:$0xff]
        %v297 = vadd.f32 %v293, %v294
        %298 = vadd.xlane.f32.xlu0 %v297
        %v299 = vpop.xlane.xlu0 %298
        %v300 = vadd.f32 %v295, %v296
        %301 = vadd.xlane.f32.xlu0 %v300
        %v302 = vpop.xlane.xlu0 %301
        %v303 = vrcp.pop 256.0
        %v304 = vmul.f32 %v299, %v303
        %v305 = vmul.f32 %v302, %v303
        %v306 = vmax.f32 %v293, %v294
        %307 = vmax.xlane.f32.xlu0 %v306
        %v308 = vpop.xlane.xlu0 %307
        %v309 = vmax.f32 %v295, %v296
        %310 = vmax.xlane.f32.xlu0 %v309
        %v311 = vpop.xlane.xlu0 %310
        %v314 = vlaneseq
        %v315 = vand.u32 %v314, 127
        %v316 = vlaneseq
        %v317 = vshrl.u32 %v316, 7
        %v318 = vsub.s32 %v315, %v317
        %v319 = vrot.slane %v304, %v318
        %v320 = vadd.s32 %v315, 4294967288
        %v321 = vlaneseq
        %v322 = vshrl.u32 %v321, 7
        %v323 = vsub.s32 %v320, %v322
        %v324 = vrot.slane %v305, %v323
        %vm325 = vcmask 130112
        %v326 = vsel %vm325, %v324, %v319
        %v330 = vlaneseq
        %v331 = vshrl.u32 %v330, 7
        %v332 = vsub.s32 %v315, %v331
        %v333 = vrot.slane %v308, %v332
        %v334 = vlaneseq
        %v335 = vshrl.u32 %v334, 7
        %v336 = vsub.s32 %v320, %v335
        %v337 = vrot.slane %v311, %v336
        %v338 = vsel %vm325, %v337, %v333
        %vm340 = vcmask 1040384
        %v341 = vsel %vm340, %v326, %v338
        %v342 = vld [vmem:[%s1] sm:$0xff]
        %v343 = vld [vmem:[%s1 + $0x8] sm:$0xff]
        %v344 = vld [vmem:[%s2] sm:$0x1]
        %v346 = vlaneseq
        %v347 = vshrl.u32 %v346, 7
        %v348 = vsub.s32 0, %v347
        %v349 = vrot.slane %v344, %v348
        %vm351 = vcmask 130048
        %v353 = vsel %vm351, %v341, 0
        %355 = vmatprep.subr.mxu0 0.0
        %356 = vmatpush1.msra.mxu0 0.0
        %357 = vmatprep.subr.mxu0 0.0
        %358 = vmatpush1.msra.mxu0 0.0
        %359 = vmatprep.subr.mxu0 0.0
        %360 = vmatpush1.msra.mxu0 0.0
        %361 = vmatprep.subr.mxu0 0.0
        %362 = vmatpush1.msra.mxu0 0.0
        %363 = vmatprep.subr.mxu0 0.0
        %364 = vmatpush1.msra.mxu0 0.0
        %365 = vmatprep.subr.mxu0 0.0
        %366 = vmatpush1.msra.mxu0 0.0
        %367 = vmatprep.subr.mxu0 0.0
        %368 = vmatpush1.msra.mxu0 0.0
        %369 = vmatprep.subr.mxu0 0.0
        %370 = vmatpush1.msra.mxu0 0.0
        %371 = vmatprep.subr.mxu0 0.0
        %372 = vmatpush1.msra.mxu0 0.0
        %373 = vmatprep.subr.mxu0 0.0
        %374 = vmatpush1.msra.mxu0 0.0
        %375 = vmatprep.subr.mxu0 0.0
        %376 = vmatpush1.msra.mxu0 0.0
        %377 = vmatprep.subr.mxu0 0.0
        %378 = vmatpush1.msra.mxu0 0.0
        %379 = vmatprep.subr.mxu0 0.0
        %380 = vmatpush1.msra.mxu0 0.0
        %381 = vmatprep.subr.mxu0 0.0
        %382 = vmatpush1.msra.mxu0 0.0
        %383 = vmatprep.subr.mxu0 0.0
        %384 = vmatpush1.msra.mxu0 %v343
        %385 = vmatprep.subr.mxu0 0.0
        %386 = vmatpush1.msra.mxu0 %v342
        %387 = vmatprep.subr.mxu0 0.0
        %388 = vmatpush2.msra.mxu0 0.0
        %389 = vmatprep.subr.mxu0 0.0
        %390 = vmatpush2.msra.mxu0 0.0
        %391 = vmatprep.subr.mxu0 0.0
        %392 = vmatpush2.msra.mxu0 0.0
        %393 = vmatprep.subr.mxu0 0.0
        %394 = vmatpush2.msra.mxu0 0.0
        %395 = vmatprep.subr.mxu0 0.0
        %396 = vmatpush2.msra.mxu0 0.0
        %397 = vmatprep.subr.mxu0 0.0
        %398 = vmatpush2.msra.mxu0 0.0
        %399 = vmatprep.subr.mxu0 0.0
        %400 = vmatpush2.msra.mxu0 0.0
        %401 = vmatprep.subr.mxu0 0.0
        %402 = vmatpush2.msra.mxu0 0.0
        %403 = vmatprep.subr.mxu0 0.0
        %404 = vmatpush2.msra.mxu0 0.0
        %405 = vmatprep.subr.mxu0 0.0
        %406 = vmatpush2.msra.mxu0 0.0
        %407 = vmatprep.subr.mxu0 0.0
        %408 = vmatpush2.msra.mxu0 0.0
        %409 = vmatprep.subr.mxu0 0.0
        %410 = vmatpush2.msra.mxu0 0.0
        %411 = vmatprep.subr.mxu0 0.0
        %412 = vmatpush2.msra.mxu0 0.0
        %413 = vmatprep.subr.mxu0 0.0
        %414 = vmatpush2.msra.mxu0 0.0
        %415 = vmatprep.subr.mxu0 0.0
        %416 = vmatpush2.msra.mxu0 0.0
        %417 = vmatprep.subr.mxu0 0.0
        %418 = vmatpush2.msra.mxu0 0.0
        %419 = vmatprep.mubr.f32.mxu0 0.0
        %420 = vmatmul.mubr.f32.gmra.mxu0 %v353
        %v421 = vpop.f32.mrf.mxu0
        %v422 = vadd.f32 %v349, %v421
        %v423 = vpop.f32.mrf.mxu0
        %424 = vdwg.mxu0
        %v425 = vmax.f32 %v422, 0.0
        %v426 = vld [vmem:[%s3] sm:$0xf]
        %v427 = vld [vmem:[%s4] sm:$0x1]
        %v429 = vlaneseq
        %v430 = vshrl.u32 %v429, 7
        %v431 = vsub.s32 0, %v430
        %v432 = vrot.slane %v427, %v431
        %vm434 = vcmask 31744
        %v436 = vsel %vm434, %v425, 0
        %vm438 = vcmask 1043456
        %v440 = vsel %vm438, %v426, 0
        %442 = vmatprep.subr.mxu0 0.0
        %443 = vmatpush1.msra.mxu0 0.0
        %444 = vmatprep.subr.mxu0 0.0
        %445 = vmatpush1.msra.mxu0 0.0
        %446 = vmatprep.subr.mxu0 0.0
        %447 = vmatpush1.msra.mxu0 0.0
        %448 = vmatprep.subr.mxu0 0.0
        %449 = vmatpush1.msra.mxu0 0.0
        %450 = vmatprep.subr.mxu0 0.0
        %451 = vmatpush1.msra.mxu0 0.0
        %452 = vmatprep.subr.mxu0 0.0
        %453 = vmatpush1.msra.mxu0 0.0
        %454 = vmatprep.subr.mxu0 0.0
        %455 = vmatpush1.msra.mxu0 0.0
        %456 = vmatprep.subr.mxu0 0.0
        %457 = vmatpush1.msra.mxu0 0.0
        %458 = vmatprep.subr.mxu0 0.0
        %459 = vmatpush1.msra.mxu0 0.0
        %460 = vmatprep.subr.mxu0 0.0
        %461 = vmatpush1.msra.mxu0 0.0
        %462 = vmatprep.subr.mxu0 0.0
        %463 = vmatpush1.msra.mxu0 0.0
        %464 = vmatprep.subr.mxu0 0.0
        %465 = vmatpush1.msra.mxu0 0.0
        %466 = vmatprep.subr.mxu0 0.0
        %467 = vmatpush1.msra.mxu0 0.0
        %468 = vmatprep.subr.mxu0 0.0
        %469 = vmatpush1.msra.mxu0 0.0
        %470 = vmatprep.subr.mxu0 0.0
        %471 = vmatpush1.msra.mxu0 0.0
        %472 = vmatprep.subr.mxu0 0.0
        %473 = vmatpush1.msra.mxu0 %v440
        %474 = vmatprep.subr.mxu0 0.0
        %475 = vmatpush2.msra.mxu0 0.0
        %476 = vmatprep.subr.mxu0 0.0
        %477 = vmatpush2.msra.mxu0 0.0
        %478 = vmatprep.subr.mxu0 0.0
        %479 = vmatpush2.msra.mxu0 0.0
        %480 = vmatprep.subr.mxu0 0.0
        %481 = vmatpush2.msra.mxu0 0.0
        %482 = vmatprep.subr.mxu0 0.0
        %483 = vmatpush2.msra.mxu0 0.0
        %484 = vmatprep.subr.mxu0 0.0
        %485 = vmatpush2.msra.mxu0 0.0
        %486 = vmatprep.subr.mxu0 0.0
        %487 = vmatpush2.msra.mxu0 0.0
        %488 = vmatprep.subr.mxu0 0.0
        %489 = vmatpush2.msra.mxu0 0.0
        %490 = vmatprep.subr.mxu0 0.0
        %491 = vmatpush2.msra.mxu0 0.0
        %492 = vmatprep.subr.mxu0 0.0
        %493 = vmatpush2.msra.mxu0 0.0
        %494 = vmatprep.subr.mxu0 0.0
        %495 = vmatpush2.msra.mxu0 0.0
        %496 = vmatprep.subr.mxu0 0.0
        %497 = vmatpush2.msra.mxu0 0.0
        %498 = vmatprep.subr.mxu0 0.0
        %499 = vmatpush2.msra.mxu0 0.0
        %500 = vmatprep.subr.mxu0 0.0
        %501 = vmatpush2.msra.mxu0 0.0
        %502 = vmatprep.subr.mxu0 0.0
        %503 = vmatpush2.msra.mxu0 0.0
        %504 = vmatprep.subr.mxu0 0.0
        %505 = vmatpush2.msra.mxu0 0.0
        %506 = vmatprep.mubr.f32.mxu0 0.0
        %507 = vmatmul.mubr.f32.gmra.mxu0 %v436
        %v508 = vpop.f32.mrf.mxu0
        %v509 = vadd.f32 %v432, %v508
        %v510 = vpop.f32.mrf.mxu0
        %511 = vdwg.mxu0
        %v513 = vrot.slane %v509, 1
        %v515 = vadd.f32 %v509, %v513
        %v516 = vxor.u32 %v515, 2147483648
        %v517 = vmul.f32 %v516, 1.442695
        %v518 = vpow.pop %v517
        %v519 = vadd.f32 %v518, 1.0
        %v520 = vrcp.pop %v519
        %v521 = vmul.f32 1.0, %v520
        %v522 = vlaneseq
        %v523 = vshrl.u32 %v522, 7
        %v524 = vsub.s32 0, %v523
        %v525 = vrot.slane %v521, %v524
        %527 = vbcast.lane.b32.xlu0 %v525, 256
        %v528 = vpop.permute.xlu0 %527
        %s530 = sor.u32 256, 8
        %531 = vbcast.lane.b32.xlu0 %v525, %s530
        %v532 = vpop.permute.xlu0 %531
        %v533 = vmul.f32 %v293, %v528
        %v534 = vmul.f32 %v294, %v528
        %v535 = vmul.f32 %v295, %v532
        %v536 = vmul.f32 %v296, %v532
        %v537 = vmax.f32 %v533, %v535
        %v538 = vrot.slane %v537, 4
        %v539 = vmax.f32 %v537, %v538
        %v540 = vrot.slane %v539, 2
        %v541 = vmax.f32 %v539, %v540
        %v542 = vrot.slane %v541, 1
        %v543 = vmax.f32 %v541, %v542
        %v544 = vmax.f32 %v534, %v536
        %v545 = vrot.slane %v544, 4
        %v546 = vmax.f32 %v544, %v545
        %v547 = vrot.slane %v546, 2
        %v548 = vmax.f32 %v546, %v547
        %v549 = vrot.slane %v548, 1
        %v550 = vmax.f32 %v548, %v549
        %v551 = vadd.f32 %v533, %v535
        %v552 = vrot.slane %v551, 4
        %v553 = vadd.f32 %v551, %v552
        %v554 = vrot.slane %v553, 2
        %v555 = vadd.f32 %v553, %v554
        %v556 = vrot.slane %v555, 1
        %v557 = vadd.f32 %v555, %v556
        %v558 = vadd.f32 %v534, %v536
        %v559 = vrot.slane %v558, 4
        %v560 = vadd.f32 %v558, %v559
        %v561 = vrot.slane %v560, 2
        %v562 = vadd.f32 %v560, %v561
        %v563 = vrot.slane %v562, 1
        %v564 = vadd.f32 %v562, %v563
        %v565 = vrcp.pop 16.0
        %v566 = vmul.f32 %v557, %v565
        %v567 = vmul.f32 %v564, %v565
        %v568 = vld [vmem:[%s5] sm:$0xff]
        %v569 = vld [vmem:[%s5 + $0x8] sm:$0xff]
        %v570 = vld [vmem:[%s5 + $0x10] sm:$0xff]
        %v571 = vld [vmem:[%s5 + $0x18] sm:$0xff]
        %v572 = vld [vmem:[%s5 + $0x20] sm:$0xff]
        %v573 = vld [vmem:[%s5 + $0x28] sm:$0xff]
        %v574 = vld [vmem:[%s5 + $0x30] sm:$0xff]
        %v575 = vld [vmem:[%s5 + $0x38] sm:$0xff]
        %v576 = vld [vmem:[%s5 + $0x40] sm:$0xff]
        %v577 = vld [vmem:[%s5 + $0x48] sm:$0xff]
        %v578 = vld [vmem:[%s5 + $0x50] sm:$0xff]
        %v579 = vld [vmem:[%s5 + $0x58] sm:$0xff]
        %v580 = vld [vmem:[%s5 + $0x60] sm:$0xff]
        %v581 = vld [vmem:[%s5 + $0x68] sm:$0xff]
        %v582 = vld [vmem:[%s5 + $0x70] sm:$0xff]
        %v583 = vld [vmem:[%s5 + $0x78] sm:$0xff]
        %v584 = vld [vmem:[%s5 + $0x80] sm:$0xff]
        %v585 = vld [vmem:[%s5 + $0x88] sm:$0xff]
        %v586 = vld [vmem:[%s5 + $0x90] sm:$0xff]
        %v587 = vld [vmem:[%s5 + $0x98] sm:$0xff]
        %v588 = vld [vmem:[%s5 + $0xa0] sm:$0xff]
        %v589 = vld [vmem:[%s5 + $0xa8] sm:$0xff]
        %v590 = vld [vmem:[%s5 + $0xb0] sm:$0xff]
        %v591 = vld [vmem:[%s5 + $0xb8] sm:$0xff]
        %v592 = vld [vmem:[%s5 + $0xc0] sm:$0xff]
        %v593 = vld [vmem:[%s5 + $0xc8] sm:$0xff]
        %v594 = vld [vmem:[%s5 + $0xd0] sm:$0xff]
        %v595 = vld [vmem:[%s5 + $0xd8] sm:$0xff]
        %v596 = vld [vmem:[%s5 + $0xe0] sm:$0xff]
        %v597 = vld [vmem:[%s5 + $0xe8] sm:$0xff]
        %v598 = vld [vmem:[%s5 + $0xf0] sm:$0xff]
        %v599 = vld [vmem:[%s5 + $0xf8] sm:$0xff]
        %v600 = vld [vmem:[%s5 + $0x100] sm:$0xff]
        %v601 = vld [vmem:[%s5 + $0x108] sm:$0xff]
        %v602 = vld [vmem:[%s5 + $0x110] sm:$0xff]
        %v603 = vld [vmem:[%s5 + $0x118] sm:$0xff]
        %v604 = vld [vmem:[%s5 + $0x120] sm:$0xff]
        %v605 = vld [vmem:[%s5 + $0x128] sm:$0xff]
        %v606 = vld [vmem:[%s5 + $0x130] sm:$0xff]
        %v607 = vld [vmem:[%s5 + $0x138] sm:$0xff]
        %v608 = vld [vmem:[%s5 + $0x140] sm:$0xff]
        %v609 = vld [vmem:[%s5 + $0x148] sm:$0xff]
        %v610 = vld [vmem:[%s5 + $0x150] sm:$0xff]
        %v611 = vld [vmem:[%s5 + $0x158] sm:$0xff]
        %v612 = vld [vmem:[%s5 + $0x160] sm:$0xff]
        %v613 = vld [vmem:[%s5 + $0x168] sm:$0xff]
        %v614 = vld [vmem:[%s5 + $0x170] sm:$0xff]
        %v615 = vld [vmem:[%s5 + $0x178] sm:$0xff]
        %v616 = vld [vmem:[%s5 + $0x180] sm:$0xff]
        %v617 = vld [vmem:[%s5 + $0x188] sm:$0xff]
        %v618 = vld [vmem:[%s5 + $0x190] sm:$0xff]
        %v619 = vld [vmem:[%s5 + $0x198] sm:$0xff]
        %v620 = vld [vmem:[%s5 + $0x1a0] sm:$0xff]
        %v621 = vld [vmem:[%s5 + $0x1a8] sm:$0xff]
        %v622 = vld [vmem:[%s5 + $0x1b0] sm:$0xff]
        %v623 = vld [vmem:[%s5 + $0x1b8] sm:$0xff]
        %v624 = vld [vmem:[%s5 + $0x1c0] sm:$0xff]
        %v625 = vld [vmem:[%s5 + $0x1c8] sm:$0xff]
        %v626 = vld [vmem:[%s5 + $0x1d0] sm:$0xff]
        %v627 = vld [vmem:[%s5 + $0x1d8] sm:$0xff]
        %v628 = vld [vmem:[%s5 + $0x1e0] sm:$0xff]
        %v629 = vld [vmem:[%s5 + $0x1e8] sm:$0xff]
        %v630 = vld [vmem:[%s5 + $0x1f0] sm:$0xff]
        %v631 = vld [vmem:[%s5 + $0x1f8] sm:$0xff]
        %v632 = vld [vmem:[%s5 + $0x200] sm:$0xff]
        %v633 = vld [vmem:[%s5 + $0x208] sm:$0xff]
        %v634 = vld [vmem:[%s5 + $0x210] sm:$0xff]
        %v635 = vld [vmem:[%s5 + $0x218] sm:$0xff]
        %v636 = vld [vmem:[%s5 + $0x220] sm:$0xff]
        %v637 = vld [vmem:[%s5 + $0x228] sm:$0xff]
        %v638 = vld [vmem:[%s5 + $0x230] sm:$0xff]
        %v639 = vld [vmem:[%s5 + $0x238] sm:$0xff]
        %v640 = vld [vmem:[%s5 + $0x240] sm:$0xff]
        %v641 = vld [vmem:[%s5 + $0x248] sm:$0xff]
        %v642 = vld [vmem:[%s5 + $0x250] sm:$0xff]
        %v643 = vld [vmem:[%s5 + $0x258] sm:$0xff]
        %v644 = vld [vmem:[%s5 + $0x260] sm:$0xff]
        %v645 = vld [vmem:[%s5 + $0x268] sm:$0xff]
        %v646 = vld [vmem:[%s5 + $0x270] sm:$0xff]
        %v647 = vld [vmem:[%s5 + $0x278] sm:$0xff]
        %v648 = vld [vmem:[%s5 + $0x280] sm:$0xff]
        %v649 = vld [vmem:[%s5 + $0x288] sm:$0xff]
        %v650 = vld [vmem:[%s5 + $0x290] sm:$0xff]
        %v651 = vld [vmem:[%s5 + $0x298] sm:$0xff]
        %v652 = vld [vmem:[%s5 + $0x2a0] sm:$0xff]
        %v653 = vld [vmem:[%s5 + $0x2a8] sm:$0xff]
        %v654 = vld [vmem:[%s5 + $0x2b0] sm:$0xff]
        %v655 = vld [vmem:[%s5 + $0x2b8] sm:$0xff]
        %v656 = vld [vmem:[%s5 + $0x2c0] sm:$0xff]
        %v657 = vld [vmem:[%s5 + $0x2c8] sm:$0xff]
        %v658 = vld [vmem:[%s5 + $0x2d0] sm:$0xff]
        %v659 = vld [vmem:[%s5 + $0x2d8] sm:$0xff]
        %v660 = vld [vmem:[%s5 + $0x2e0] sm:$0xff]
        %v661 = vld [vmem:[%s5 + $0x2e8] sm:$0xff]
        %v662 = vld [vmem:[%s5 + $0x2f0] sm:$0xff]
        %v663 = vld [vmem:[%s5 + $0x2f8] sm:$0xff]
        %v664 = vld [vmem:[%s5 + $0x300] sm:$0xff]
        %v665 = vld [vmem:[%s5 + $0x308] sm:$0xff]
        %v666 = vld [vmem:[%s5 + $0x310] sm:$0xff]
        %v667 = vld [vmem:[%s5 + $0x318] sm:$0xff]
        %v668 = vld [vmem:[%s5 + $0x320] sm:$0xff]
        %v669 = vld [vmem:[%s5 + $0x328] sm:$0xff]
        %v670 = vld [vmem:[%s5 + $0x330] sm:$0xff]
        %v671 = vld [vmem:[%s5 + $0x338] sm:$0xff]
        %v672 = vld [vmem:[%s5 + $0x340] sm:$0xff]
        %v673 = vld [vmem:[%s5 + $0x348] sm:$0xff]
        %v674 = vld [vmem:[%s5 + $0x350] sm:$0xff]
        %v675 = vld [vmem:[%s5 + $0x358] sm:$0xff]
        %v676 = vld [vmem:[%s5 + $0x360] sm:$0xff]
        %v677 = vld [vmem:[%s5 + $0x368] sm:$0xff]
        %v678 = vld [vmem:[%s5 + $0x370] sm:$0xff]
        %v679 = vld [vmem:[%s5 + $0x378] sm:$0xff]
        %v680 = vld [vmem:[%s5 + $0x380] sm:$0xff]
        %v681 = vld [vmem:[%s5 + $0x388] sm:$0xff]
        %v682 = vld [vmem:[%s5 + $0x390] sm:$0xff]
        %v683 = vld [vmem:[%s5 + $0x398] sm:$0xff]
        %v684 = vld [vmem:[%s5 + $0x3a0] sm:$0xff]
        %v685 = vld [vmem:[%s5 + $0x3a8] sm:$0xff]
        %v686 = vld [vmem:[%s5 + $0x3b0] sm:$0xff]
        %v687 = vld [vmem:[%s5 + $0x3b8] sm:$0xff]
        %v688 = vld [vmem:[%s5 + $0x3c0] sm:$0xff]
        %v689 = vld [vmem:[%s5 + $0x3c8] sm:$0xff]
        %v690 = vld [vmem:[%s5 + $0x3d0] sm:$0xff]
        %v691 = vld [vmem:[%s5 + $0x3d8] sm:$0xff]
        %v692 = vld [vmem:[%s5 + $0x3e0] sm:$0xff]
        %v693 = vld [vmem:[%s5 + $0x3e8] sm:$0xff]
        %v694 = vld [vmem:[%s5 + $0x3f0] sm:$0xff]
        %v695 = vld [vmem:[%s5 + $0x3f8] sm:$0xff]
        %696 = vmatprep.subr.mxu0 %v599
        %697 = vmatpush1.msra.mxu0 %v598
        %698 = vmatprep.subr.mxu0 %v597
        %699 = vmatpush1.msra.mxu0 %v596
        %700 = vmatprep.subr.mxu0 %v595
        %701 = vmatpush1.msra.mxu0 %v594
        %702 = vmatprep.subr.mxu0 %v593
        %703 = vmatpush1.msra.mxu0 %v592
        %704 = vmatprep.subr.mxu0 %v591
        %705 = vmatpush1.msra.mxu0 %v590
        %706 = vmatprep.subr.mxu0 %v589
        %707 = vmatpush1.msra.mxu0 %v588
        %708 = vmatprep.subr.mxu0 %v587
        %709 = vmatpush1.msra.mxu0 %v586
        %710 = vmatprep.subr.mxu0 %v585
        %711 = vmatpush1.msra.mxu0 %v584
        %712 = vmatprep.subr.mxu0 %v583
        %713 = vmatpush1.msra.mxu0 %v582
        %714 = vmatprep.subr.mxu0 %v581
        %715 = vmatpush1.msra.mxu0 %v580
        %716 = vmatprep.subr.mxu0 %v579
        %717 = vmatpush1.msra.mxu0 %v578
        %718 = vmatprep.subr.mxu0 %v577
        %719 = vmatpush1.msra.mxu0 %v576
        %720 = vmatprep.subr.mxu0 %v575
        %721 = vmatpush1.msra.mxu0 %v574
        %722 = vmatprep.subr.mxu0 %v573
        %723 = vmatpush1.msra.mxu0 %v572
        %724 = vmatprep.subr.mxu0 %v571
        %725 = vmatpush1.msra.mxu0 %v570
        %726 = vmatprep.subr.mxu0 %v569
        %727 = vmatpush1.msra.mxu0 %v568
        %728 = vmatprep.subr.mxu0 %v631
        %729 = vmatpush2.msra.mxu0 %v630
        %730 = vmatprep.subr.mxu0 %v629
        %731 = vmatpush2.msra.mxu0 %v628
        %732 = vmatprep.subr.mxu0 %v627
        %733 = vmatpush2.msra.mxu0 %v626
        %734 = vmatprep.subr.mxu0 %v625
        %735 = vmatpush2.msra.mxu0 %v624
        %736 = vmatprep.subr.mxu0 %v623
        %737 = vmatpush2.msra.mxu0 %v622
        %738 = vmatprep.subr.mxu0 %v621
        %739 = vmatpush2.msra.mxu0 %v620
        %740 = vmatprep.subr.mxu0 %v619
        %741 = vmatpush2.msra.mxu0 %v618
        %742 = vmatprep.subr.mxu0 %v617
        %743 = vmatpush2.msra.mxu0 %v616
        %744 = vmatprep.subr.mxu0 %v615
        %745 = vmatpush2.msra.mxu0 %v614
        %746 = vmatprep.subr.mxu0 %v613
        %747 = vmatpush2.msra.mxu0 %v612
        %748 = vmatprep.subr.mxu0 %v611
        %749 = vmatpush2.msra.mxu0 %v610
        %750 = vmatprep.subr.mxu0 %v609
        %751 = vmatpush2.msra.mxu0 %v608
        %752 = vmatprep.subr.mxu0 %v607
        %753 = vmatpush2.msra.mxu0 %v606
        %754 = vmatprep.subr.mxu0 %v605
        %755 = vmatpush2.msra.mxu0 %v604
        %756 = vmatprep.subr.mxu0 %v603
        %757 = vmatpush2.msra.mxu0 %v602
        %758 = vmatprep.subr.mxu0 %v601
        %759 = vmatpush2.msra.mxu0 %v600
        %760 = vmatprep.mubr.f32.mxu0 %v550
        %761 = vmatmul.mubr.f32.gmra.mxu0 %v543
        %v762 = vpop.f32.mrf.mxu0
        %v763 = vadd.f32 0.0, %v762
        %v764 = vpop.f32.mrf.mxu0
        %v765 = vadd.f32 0.0, %v764
        %766 = vdwg.mxu0
        %767 = vmatprep.subr.mxu0 %v663
        %768 = vmatpush1.msra.mxu0 %v662
        %769 = vmatprep.subr.mxu0 %v661
        %770 = vmatpush1.msra.mxu0 %v660
        %771 = vmatprep.subr.mxu0 %v659
        %772 = vmatpush1.msra.mxu0 %v658
        %773 = vmatprep.subr.mxu0 %v657
        %774 = vmatpush1.msra.mxu0 %v656
        %775 = vmatprep.subr.mxu0 %v655
        %776 = vmatpush1.msra.mxu0 %v654
        %777 = vmatprep.subr.mxu0 %v653
        %778 = vmatpush1.msra.mxu0 %v652
        %779 = vmatprep.subr.mxu0 %v651
        %780 = vmatpush1.msra.mxu0 %v650
        %781 = vmatprep.subr.mxu0 %v649
        %782 = vmatpush1.msra.mxu0 %v648
        %783 = vmatprep.subr.mxu0 %v647
        %784 = vmatpush1.msra.mxu0 %v646
        %785 = vmatprep.subr.mxu0 %v645
        %786 = vmatpush1.msra.mxu0 %v644
        %787 = vmatprep.subr.mxu0 %v643
        %788 = vmatpush1.msra.mxu0 %v642
        %789 = vmatprep.subr.mxu0 %v641
        %790 = vmatpush1.msra.mxu0 %v640
        %791 = vmatprep.subr.mxu0 %v639
        %792 = vmatpush1.msra.mxu0 %v638
        %793 = vmatprep.subr.mxu0 %v637
        %794 = vmatpush1.msra.mxu0 %v636
        %795 = vmatprep.subr.mxu0 %v635
        %796 = vmatpush1.msra.mxu0 %v634
        %797 = vmatprep.subr.mxu0 %v633
        %798 = vmatpush1.msra.mxu0 %v632
        %799 = vmatprep.subr.mxu0 %v695
        %800 = vmatpush2.msra.mxu0 %v694
        %801 = vmatprep.subr.mxu0 %v693
        %802 = vmatpush2.msra.mxu0 %v692
        %803 = vmatprep.subr.mxu0 %v691
        %804 = vmatpush2.msra.mxu0 %v690
        %805 = vmatprep.subr.mxu0 %v689
        %806 = vmatpush2.msra.mxu0 %v688
        %807 = vmatprep.subr.mxu0 %v687
        %808 = vmatpush2.msra.mxu0 %v686
        %809 = vmatprep.subr.mxu0 %v685
        %810 = vmatpush2.msra.mxu0 %v684
        %811 = vmatprep.subr.mxu0 %v683
        %812 = vmatpush2.msra.mxu0 %v682
        %813 = vmatprep.subr.mxu0 %v681
        %814 = vmatpush2.msra.mxu0 %v680
        %815 = vmatprep.subr.mxu0 %v679
        %816 = vmatpush2.msra.mxu0 %v678
        %817 = vmatprep.subr.mxu0 %v677
        %818 = vmatpush2.msra.mxu0 %v676
        %819 = vmatprep.subr.mxu0 %v675
        %820 = vmatpush2.msra.mxu0 %v674
        %821 = vmatprep.subr.mxu0 %v673
        %822 = vmatpush2.msra.mxu0 %v672
        %823 = vmatprep.subr.mxu0 %v671
        %824 = vmatpush2.msra.mxu0 %v670
        %825 = vmatprep.subr.mxu0 %v669
        %826 = vmatpush2.msra.mxu0 %v668
        %827 = vmatprep.subr.mxu0 %v667
        %828 = vmatpush2.msra.mxu0 %v666
        %829 = vmatprep.subr.mxu0 %v665
        %830 = vmatpush2.msra.mxu0 %v664
        %831 = vmatprep.mubr.f32.mxu0 %v567
        %832 = vmatmul.mubr.f32.gmra.mxu0 %v566
        %v833 = vpop.f32.mrf.mxu0
        %v834 = vadd.f32 %v763, %v833
        %v835 = vpop.f32.mrf.mxu0
        %v836 = vadd.f32 %v765, %v835
        %837 = vdwg.mxu0
        %s838 = sld [smem:[#allocation2]]
        %v839 = vstv %s838
        %v840 = vmul.f32 %v834, %v839
        %v841 = vmul.f32 %v836, %v839
        %s842 = sld [smem:[#allocation2 + $0x1]]
        %v843 = vstv %s842
        %v844 = vadd.f32 %v840, %v843
        %v845 = vadd.f32 %v841, %v843
        %v846 = vxor.u32 %v844, 2147483648
        %v847 = vxor.u32 %v845, 2147483648
        %v848 = vmul.f32 %v846, 1.442695
        %v849 = vpow.pop %v848
        %v850 = vmul.f32 %v847, 1.442695
        %v851 = vpow.pop %v850
        %v852 = vadd.f32 %v849, 1.0
        %v853 = vadd.f32 %v851, 1.0
        %v854 = vrcp.pop %v852
        %v855 = vmul.f32 1.0, %v854
        %v856 = vrcp.pop %v853
        %v857 = vmul.f32 1.0, %v856
        %v858 = vlaneseq
        %v859 = vshrl.u32 %v858, 7
        %v860 = vsub.s32 0, %v859
        %v861 = vrot.slane %v855, %v860
        %v862 = vlaneseq
        %v863 = vshrl.u32 %v862, 7
        %v864 = vsub.s32 0, %v863
        %v865 = vrot.slane %v857, %v864
        %v866 = vmul.f32 %v533, %v861
        %v867 = vmul.f32 %v534, %v865
        %v868 = vmul.f32 %v535, %v861
        %v869 = vmul.f32 %v536, %v865
        %870 = vst [vmem:[%s292] sm:$0xff] %v866
        %871 = vst [vmem:[%s292 + $0x8] sm:$0xff] %v867
        %872 = vst [vmem:[%s292 + $0x10] sm:$0xff] %v868
        %873 = vst [vmem:[%s292 + $0x18] sm:$0xff] %v869
        %p874 = scmp.lt.s32.totalorder %s19, 1
        %s875 = scalar_select %p874, %s19, 1
        %s876 = smul.addr %s875, 4
        %s877 = smul.addr %s876, 8
        %s878 = scalar_lea.vmem %s7, %s877
        // Predicated region
        $region53: #{cbam_forward.1} parent=47 // pred_check
          %p879 = pneg %p189
        $region54: #{cbam_forward.1} parent=47 // pred_check_branch
          %881 = sbr.rel (%p879) target = $region56
        $region55: #{cbam_forward.1} parent=47 // pred_region
          _
        $region56: #{cbam_forward.1} parent=47 // pred_fallthru
          _
      $region48: #{cbam_forward.1} parent=5 // pred_fallthru
        _
      %p882 = scmp.le.s32.totalorder 2, %s14
      // Predicated region
      $region57: #{cbam_forward.1} parent=5 // pred_check
        %p883 = pneg %p882
      $region58: #{cbam_forward.1} parent=5 // pred_check_branch
        %885 = sbr.rel (%p883) target = $region60
      $region59: #{cbam_forward.1} parent=5 // pred_region
        %s886 = ssub.s32 %s14, 2
        // Predicated region
        $region61: #{cbam_forward.1} parent=59 // pred_check
          %p887 = pneg %p195
        $region62: #{cbam_forward.1} parent=59 // pred_check_branch
          %889 = sbr.rel (%p887) target = $region64
        $region63: #{cbam_forward.1} parent=59 // pred_region
          %p890 = scmp.lt.s32.totalorder %s20, 1
          %s891 = scalar_select %p890, %s20, 1
          %s892 = smul.addr %s891, 4
          %s893 = smul.addr %s892, 8
          %s894 = scalar_lea.vmem %s7, %s893
        $region64: #{cbam_forward.1} parent=59 // pred_fallthru
          _
      $region60: #{cbam_forward.1} parent=5 // pred_fallthru
        _
    $region6: #{cbam_forward.1} parent=1 // loop_footer
      %s18 = sadd.s32 1, %s14
    $region7: #{cbam_forward.1} parent=1 // loop_footer_branch
      %13 = sbr.rel target = $region3
    $region8: #{cbam_forward.1} parent=1 // loop_exit
      _
    %895 = vsyncpa [#allocation3], 1
    %s896 = scalar_lea.sflag [#allocation3], 1
    %897 = vsyncpa %s896, 1

</llo_original>
